<compile_context>
chip_gen: v7x
topology: tpu7x:2x2x1
jax: 0.10.0
libtpu: 0.0.40
codegen_flags: <defaults>
</compile_context>

<pallas_src>
import math

import jax
import jax.numpy as jnp
from jax.experimental import pallas as pl
from jax.experimental.pallas import tpu as pltpu


def _round_up(x, mult):
    return ((x + mult - 1) // mult) * mult


def _linear_kernel(v_ref, w_ref, o_ref):
    # v_ref: (tm, K)  row tile of the flattened input (original dtype, streamed once)
    # w_ref: (K, N)   full weight, constant block index -> fetched once, stays in VMEM
    # o_ref: (tm, N)  unpadded output tile (N == hidden_size, equals full array dim)
    x = v_ref[...].astype(w_ref.dtype)  # no-op if dtypes match; in-kernel bf16 cast otherwise
    o_ref[...] = jnp.dot(
        x, w_ref[...], preferred_element_type=jnp.float32
    ).astype(o_ref.dtype)


def preprocessed_extractor(v, weight, *, tm=1024, input_dtype=None):
    """Forward pass of PreprocessedExtractor: v @ weight.T (no bias).

    v:           (..., in_features) array
    weight:      (hidden_size, in_features)  -- PyTorch Linear layout
    tm:          row-tile cap (rounded to the sublane granularity)
    input_dtype: optional MXU compute dtype (e.g. jnp.bfloat16). The cast happens inside
                 the kernel, so it adds no HBM traffic; accumulation is always f32 and the
                 output keeps v.dtype.
    returns (..., hidden_size)
    """
    in_features = v.shape[-1]
    hidden_size = weight.shape[0]
    assert weight.shape[1] == in_features

    lead_shape = v.shape[:-1]
    m = 1
    for d in lead_shape:
        m *= d
    out_dtype = v.dtype
    v2d = v.reshape(m, in_features)

    compute_dtype = jnp.dtype(input_dtype) if input_dtype is not None else jnp.dtype(v2d.dtype)
    # Weight is tiny (K x N); cast it once in the wrapper to the compute dtype.
    w_t = weight.T.astype(compute_dtype)  # (in_features, hidden_size)

    # Sublane granularity of the *streamed* input dtype (v stays in its original dtype).
    isz = jnp.dtype(v2d.dtype).itemsize
    sub = 8 if isz >= 4 else (16 if isz == 2 else 32)

    # Row tile: big enough to amortize the ~0.35 us/step grid overhead, small enough to
    # fit the default scoped VMEM on every generation (v5e 16 MiB, v6e/v7x 32 MiB).
    cap = max(sub, _round_up(min(int(tm), 2048), sub))
    if m <= cap:
        tm_eff = m          # single block covering the whole array (full-dim block is legal)
    else:
        tm_eff = cap        # multiple of the sublane granularity; last block may be partial
    grid = (pl.cdiv(m, tm_eff),)

    cost = pl.CostEstimate(
        flops=2 * m * in_features * hidden_size,
        transcendentals=0,
        bytes_accessed=(
            m * in_features * isz
            + in_features * hidden_size * jnp.dtype(compute_dtype).itemsize
            + m * hidden_size * jnp.dtype(out_dtype).itemsize
        ),
    )

    out = pl.pallas_call(
        _linear_kernel,
        out_shape=jax.ShapeDtypeStruct((m, hidden_size), out_dtype),
        grid_spec=pltpu.PrefetchScalarGridSpec(
            num_scalar_prefetch=0,
            grid=grid,
            in_specs=[
                # Full-K block (1000 equals the array dim, so no 128-divisibility needed).
                pl.BlockSpec((tm_eff, in_features), lambda i: (i, 0)),
                # Constant block index: weight is fetched once and stays resident in VMEM.
                pl.BlockSpec((in_features, hidden_size), lambda i: (0, 0)),
            ],
            # Unpadded output: hidden_size equals the full array dim (masked narrow store
            # is cheap here; the kernel is DMA-bound, not store-slot-bound).
            out_specs=pl.BlockSpec((tm_eff, hidden_size), lambda i: (i, 0)),
        ),
        compiler_params=pltpu.CompilerParams(
            # Independent M tiles: shards across both TensorCores on v7x when grid > 1.
            dimension_semantics=("parallel",),
        ),
        cost_estimate=cost,
    )(v2d, w_t)

    return out.reshape(*lead_shape, hidden_size)


if __name__ == "__main__":
    key = jax.random.PRNGKey(0)
    k_v, k_w, k_v2 = jax.random.split(key, 3)

    in_features = 1000      # vgg_layer == 'lastlayer'
    hidden_size = 32

    # Deterministic synthetic parameters (PyTorch Linear weight layout: (out, in)).
    bound = 1.0 / math.sqrt(in_features)
    weight = jax.random.uniform(
        k_w, (hidden_size, in_features), jnp.float32, minval=-bound, maxval=bound
    )

    # --- small case (batch=2, num_objects=8): single grid step, f32 path ---
    v = jax.random.normal(k_v, (2, 8, in_features), jnp.float32)
    out = jax.block_until_ready(preprocessed_extractor(v, weight))
    ref = jnp.einsum("boi,hi->boh", v, weight)
    assert out.shape == (2, 8, hidden_size)
    assert jnp.allclose(out, ref, atol=1e-4, rtol=1e-4)

    # --- bf16 compute path: cast happens inside the kernel (zero extra HBM traffic) ---
    out_bf16 = jax.block_until_ready(
        preprocessed_extractor(v, weight, input_dtype=jnp.bfloat16)
    )
    assert out_bf16.shape == (2, 8, hidden_size)
    assert jnp.allclose(out_bf16, ref, atol=5e-2, rtol=5e-2)

    # --- ragged M (3*70=210 rows), small tm -> grid=4 with a partial last block ---
    v2 = jax.random.normal(k_v2, (3, 70, in_features), jnp.float32)
    out2 = jax.block_until_ready(preprocessed_extractor(v2, weight, tm=64))
    ref2 = jnp.einsum("boi,hi->boh", v2, weight)
    assert out2.shape == (3, 70, hidden_size)
    assert jnp.allclose(out2, ref2, atol=1e-4, rtol=1e-4)

    # --- same ragged M with the default tm -> single full-dim block (210 rows) ---
    out3 = jax.block_until_ready(preprocessed_extractor(v2, weight))
    assert out3.shape == (3, 70, hidden_size)
    assert jnp.allclose(out3, ref2, atol=1e-4, rtol=1e-4)

    print("KERNEL_OK")
</pallas_src>

<mosaic_0001>
module attributes {stable_mosaic.version = 11 : i64} {
  func.func @_linear_kernel(%arg0: i32, %arg1: memref<16x1000xf32, #tpu.memory_space<vmem>>, %arg2: memref<1000x32xf32, #tpu.memory_space<vmem>>, %arg3: memref<16x32xf32, #tpu.memory_space<vmem>>) attributes {dimension_semantics = [#tpu.dimension_semantics<parallel>], iteration_bounds = array<i64: 1>, scalar_prefetch = 0 : i64, scratch_operands = 0 : i64, tpu.core_type = #tpu.core_type<tc>, window_params = [{transform_indices = @transform_0, window_bounds = array<i64: 16, 1000>}, {pipeline_mode = #tpu.pipeline_mode<synchronous>, transform_indices = @transform_1, window_bounds = array<i64: 1000, 32>}, {transform_indices = @transform_2, window_bounds = array<i64: 16, 32>}]} {
    %c0 = arith.constant 0 : index
    %c0_0 = arith.constant 0 : index
    %0 = vector.load %arg1[%c0, %c0_0] : memref<16x1000xf32, #tpu.memory_space<vmem>>, vector<16x1000xf32>
    %c0_1 = arith.constant 0 : index
    %c0_2 = arith.constant 0 : index
    %1 = vector.load %arg2[%c0_1, %c0_2] : memref<1000x32xf32, #tpu.memory_space<vmem>>, vector<1000x32xf32>
    %cst = arith.constant dense<0.000000e+00> : vector<16x32xf32>
    %2 = tpu.matmul %0, %1, %cst {dimension_numbers = #tpu.dot_dimension_numbers<[1], [0], [0], [1], [0, 0, 1, 1], [], []>} : vector<16x1000xf32>, vector<1000x32xf32>, vector<16x32xf32> -> vector<16x32xf32>
    %c0_3 = arith.constant 0 : index
    %c0_4 = arith.constant 0 : index
    %3 = vector.load %arg3[%c0_3, %c0_4] : memref<16x32xf32, #tpu.memory_space<vmem>>, vector<16x32xf32>
    tpu.vector_store %arg3[%c0_3, %c0_4], %2 {strides = array<i32>} : memref<16x32xf32, #tpu.memory_space<vmem>>, vector<16x32xf32>,
    return
  }
  func.func @transform_0(%arg0: i32) -> (i32, i32) {
    %c0_i32 = arith.constant 0 : i32
    %c0_i32_0 = arith.constant 0 : i32
    return %arg0, %c0_i32 : i32, i32
  }
  func.func @transform_1(%arg0: i32) -> (i32, i32) {
    %c0_i32 = arith.constant 0 : i32
    %c0_i32_0 = arith.constant 0 : i32
    %c0_i32_1 = arith.constant 0 : i32
    return %c0_i32, %c0_i32_0 : i32, i32
  }
  func.func @transform_2(%arg0: i32) -> (i32, i32) {
    %c0_i32 = arith.constant 0 : i32
    %c0_i32_0 = arith.constant 0 : i32
    return %arg0, %c0_i32 : i32, i32
  }
}

</mosaic_0001>

<llo_original>
// kernel: tpu_custom_call.1
$region0: #{tpu_custom_call.1}
  #allocation0 [shape = 'u32[]', space=smem, size = 0x4, offset = 0x4, fixed_abs, tag = 'smem constant byte address 0x4 - core index']
  #allocation1 [shape = 'u32[144,128]{1,0:T(1,128)}', space=vmem, size = 0x12000, scoped, tag = 'internal scratch']
  %s0 = inlined_call_operand.vmem [shape: f32[16,1000], index: 0, kind: input, shape index: {}]
  %s1 = inlined_call_operand.vmem [shape: f32[1000,32], index: 1, kind: input, shape index: {}]
  %s2 = inlined_call_operand.hbm [shape: f32[16,32], index: 2, kind: output, shape index: {}]
  %s3 = sld [smem:[#allocation0]]
  $region18: #{tpu_custom_call.1} parent=0
    _
  %s5 = ssub.s32 1, %s3
  %s6 = scalar_select 0, %s5, %s3
  $region1: #{tpu_custom_call.1} parent=0
    #allocation2 [shape = 'u8[8192]{0}', space=vmem, size = 0x2000, scoped, tag = 'output window, operand 0, single buffered']
    #allocation3 [shape = 's32[1]{0}', space=sflag, size = 0x4, scoped, tag = 'scoped memory for tpu_custom_call.1']
    %7 = vsyncpa [#allocation3], 0
    // Predicated region
    $region2: #{tpu_custom_call.1} parent=1 // pred_check
      _
    $region3: #{tpu_custom_call.1} parent=1 // pred_check_branch
      %9 = sbr.rel (0) target = $region5
    $region4: #{tpu_custom_call.1} parent=1 // pred_region
      _
    $region5: #{tpu_custom_call.1} parent=1 // pred_fallthru
      _
    // Predicated region
    $region6: #{tpu_custom_call.1} parent=1 // pred_check
      _
    $region7: #{tpu_custom_call.1} parent=1 // pred_check_branch
      %11 = sbr.rel (0) target = $region9
    $region8: #{tpu_custom_call.1} parent=1 // pred_region
      _
    $region9: #{tpu_custom_call.1} parent=1 // pred_fallthru
      _
    %v12 = vld [vmem:[%s0] sm:$0xff]
    %v13 = vld [vmem:[%s0 + $0x8] sm:$0xff]
    %v14 = vld [vmem:[%s0 + $0x10] sm:$0xff]
    %v15 = vld [vmem:[%s0 + $0x18] sm:$0xff]
    %v16 = vld [vmem:[%s0 + $0x20] sm:$0xff]
    %v17 = vld [vmem:[%s0 + $0x28] sm:$0xff]
    %v18 = vld [vmem:[%s0 + $0x30] sm:$0xff]
    %v19 = vld [vmem:[%s0 + $0x38] sm:$0xff]
    %v20 = vld [vmem:[%s0 + $0x40] sm:$0xff]
    %v21 = vld [vmem:[%s0 + $0x48] sm:$0xff]
    %v22 = vld [vmem:[%s0 + $0x50] sm:$0xff]
    %v23 = vld [vmem:[%s0 + $0x58] sm:$0xff]
    %v24 = vld [vmem:[%s0 + $0x60] sm:$0xff]
    %v25 = vld [vmem:[%s0 + $0x68] sm:$0xff]
    %v26 = vld [vmem:[%s0 + $0x70] sm:$0xff]
    %v27 = vld [vmem:[%s0 + $0x78] sm:$0xff]
    %v28 = vld [vmem:[%s1] sm:$0xff]
    %v29 = vld [vmem:[%s1 + $0x8] sm:$0xff]
    %v30 = vld [vmem:[%s1 + $0x10] sm:$0xff]
    %v31 = vld [vmem:[%s1 + $0x18] sm:$0xff]
    %v32 = vld [vmem:[%s1 + $0x20] sm:$0xff]
    %v33 = vld [vmem:[%s1 + $0x28] sm:$0xff]
    %v34 = vld [vmem:[%s1 + $0x30] sm:$0xff]
    %v35 = vld [vmem:[%s1 + $0x38] sm:$0xff]
    %v36 = vld [vmem:[%s1 + $0x40] sm:$0xff]
    %v37 = vld [vmem:[%s1 + $0x48] sm:$0xff]
    %v38 = vld [vmem:[%s1 + $0x50] sm:$0xff]
    %v39 = vld [vmem:[%s1 + $0x58] sm:$0xff]
    %v40 = vld [vmem:[%s1 + $0x60] sm:$0xff]
    %v41 = vld [vmem:[%s1 + $0x68] sm:$0xff]
    %v42 = vld [vmem:[%s1 + $0x70] sm:$0xff]
    %v43 = vld [vmem:[%s1 + $0x78] sm:$0xff]
    %v44 = vld [vmem:[%s1 + $0x80] sm:$0xff]
    %v45 = vld [vmem:[%s1 + $0x88] sm:$0xff]
    %v46 = vld [vmem:[%s1 + $0x90] sm:$0xff]
    %v47 = vld [vmem:[%s1 + $0x98] sm:$0xff]
    %v48 = vld [vmem:[%s1 + $0xa0] sm:$0xff]
    %v49 = vld [vmem:[%s1 + $0xa8] sm:$0xff]
    %v50 = vld [vmem:[%s1 + $0xb0] sm:$0xff]
    %v51 = vld [vmem:[%s1 + $0xb8] sm:$0xff]
    %v52 = vld [vmem:[%s1 + $0xc0] sm:$0xff]
    %v53 = vld [vmem:[%s1 + $0xc8] sm:$0xff]
    %v54 = vld [vmem:[%s1 + $0xd0] sm:$0xff]
    %v55 = vld [vmem:[%s1 + $0xd8] sm:$0xff]
    %v56 = vld [vmem:[%s1 + $0xe0] sm:$0xff]
    %v57 = vld [vmem:[%s1 + $0xe8] sm:$0xff]
    %v58 = vld [vmem:[%s1 + $0xf0] sm:$0xff]
    %v59 = vld [vmem:[%s1 + $0xf8] sm:$0xff]
    %v60 = vld [vmem:[%s1 + $0x100] sm:$0xff]
    %v61 = vld [vmem:[%s1 + $0x108] sm:$0xff]
    %v62 = vld [vmem:[%s1 + $0x110] sm:$0xff]
    %v63 = vld [vmem:[%s1 + $0x118] sm:$0xff]
    %v64 = vld [vmem:[%s1 + $0x120] sm:$0xff]
    %v65 = vld [vmem:[%s1 + $0x128] sm:$0xff]
    %v66 = vld [vmem:[%s1 + $0x130] sm:$0xff]
    %v67 = vld [vmem:[%s1 + $0x138] sm:$0xff]
    %v68 = vld [vmem:[%s1 + $0x140] sm:$0xff]
    %v69 = vld [vmem:[%s1 + $0x148] sm:$0xff]
    %v70 = vld [vmem:[%s1 + $0x150] sm:$0xff]
    %v71 = vld [vmem:[%s1 + $0x158] sm:$0xff]
    %v72 = vld [vmem:[%s1 + $0x160] sm:$0xff]
    %v73 = vld [vmem:[%s1 + $0x168] sm:$0xff]
    %v74 = vld [vmem:[%s1 + $0x170] sm:$0xff]
    %v75 = vld [vmem:[%s1 + $0x178] sm:$0xff]
    %v76 = vld [vmem:[%s1 + $0x180] sm:$0xff]
    %v77 = vld [vmem:[%s1 + $0x188] sm:$0xff]
    %v78 = vld [vmem:[%s1 + $0x190] sm:$0xff]
    %v79 = vld [vmem:[%s1 + $0x198] sm:$0xff]
    %v80 = vld [vmem:[%s1 + $0x1a0] sm:$0xff]
    %v81 = vld [vmem:[%s1 + $0x1a8] sm:$0xff]
    %v82 = vld [vmem:[%s1 + $0x1b0] sm:$0xff]
    %v83 = vld [vmem:[%s1 + $0x1b8] sm:$0xff]
    %v84 = vld [vmem:[%s1 + $0x1c0] sm:$0xff]
    %v85 = vld [vmem:[%s1 + $0x1c8] sm:$0xff]
    %v86 = vld [vmem:[%s1 + $0x1d0] sm:$0xff]
    %v87 = vld [vmem:[%s1 + $0x1d8] sm:$0xff]
    %v88 = vld [vmem:[%s1 + $0x1e0] sm:$0xff]
    %v89 = vld [vmem:[%s1 + $0x1e8] sm:$0xff]
    %v90 = vld [vmem:[%s1 + $0x1f0] sm:$0xff]
    %v91 = vld [vmem:[%s1 + $0x1f8] sm:$0xff]
    %v92 = vld [vmem:[%s1 + $0x200] sm:$0xff]
    %v93 = vld [vmem:[%s1 + $0x208] sm:$0xff]
    %v94 = vld [vmem:[%s1 + $0x210] sm:$0xff]
    %v95 = vld [vmem:[%s1 + $0x218] sm:$0xff]
    %v96 = vld [vmem:[%s1 + $0x220] sm:$0xff]
    %v97 = vld [vmem:[%s1 + $0x228] sm:$0xff]
    %v98 = vld [vmem:[%s1 + $0x230] sm:$0xff]
    %v99 = vld [vmem:[%s1 + $0x238] sm:$0xff]
    %v100 = vld [vmem:[%s1 + $0x240] sm:$0xff]
    %v101 = vld [vmem:[%s1 + $0x248] sm:$0xff]
    %v102 = vld [vmem:[%s1 + $0x250] sm:$0xff]
    %v103 = vld [vmem:[%s1 + $0x258] sm:$0xff]
    %v104 = vld [vmem:[%s1 + $0x260] sm:$0xff]
    %v105 = vld [vmem:[%s1 + $0x268] sm:$0xff]
    %v106 = vld [vmem:[%s1 + $0x270] sm:$0xff]
    %v107 = vld [vmem:[%s1 + $0x278] sm:$0xff]
    %v108 = vld [vmem:[%s1 + $0x280] sm:$0xff]
    %v109 = vld [vmem:[%s1 + $0x288] sm:$0xff]
    %v110 = vld [vmem:[%s1 + $0x290] sm:$0xff]
    %v111 = vld [vmem:[%s1 + $0x298] sm:$0xff]
    %v112 = vld [vmem:[%s1 + $0x2a0] sm:$0xff]
    %v113 = vld [vmem:[%s1 + $0x2a8] sm:$0xff]
    %v114 = vld [vmem:[%s1 + $0x2b0] sm:$0xff]
    %v115 = vld [vmem:[%s1 + $0x2b8] sm:$0xff]
    %v116 = vld [vmem:[%s1 + $0x2c0] sm:$0xff]
    %v117 = vld [vmem:[%s1 + $0x2c8] sm:$0xff]
    %v118 = vld [vmem:[%s1 + $0x2d0] sm:$0xff]
    %v119 = vld [vmem:[%s1 + $0x2d8] sm:$0xff]
    %v120 = vld [vmem:[%s1 + $0x2e0] sm:$0xff]
    %v121 = vld [vmem:[%s1 + $0x2e8] sm:$0xff]
    %v122 = vld [vmem:[%s1 + $0x2f0] sm:$0xff]
    %v123 = vld [vmem:[%s1 + $0x2f8] sm:$0xff]
    %v124 = vld [vmem:[%s1 + $0x300] sm:$0xff]
    %v125 = vld [vmem:[%s1 + $0x308] sm:$0xff]
    %v126 = vld [vmem:[%s1 + $0x310] sm:$0xff]
    %v127 = vld [vmem:[%s1 + $0x318] sm:$0xff]
    %v128 = vld [vmem:[%s1 + $0x320] sm:$0xff]
    %v129 = vld [vmem:[%s1 + $0x328] sm:$0xff]
    %v130 = vld [vmem:[%s1 + $0x330] sm:$0xff]
    %v131 = vld [vmem:[%s1 + $0x338] sm:$0xff]
    %v132 = vld [vmem:[%s1 + $0x340] sm:$0xff]
    %v133 = vld [vmem:[%s1 + $0x348] sm:$0xff]
    %v134 = vld [vmem:[%s1 + $0x350] sm:$0xff]
    %v135 = vld [vmem:[%s1 + $0x358] sm:$0xff]
    %v136 = vld [vmem:[%s1 + $0x360] sm:$0xff]
    %v137 = vld [vmem:[%s1 + $0x368] sm:$0xff]
    %v138 = vld [vmem:[%s1 + $0x370] sm:$0xff]
    %v139 = vld [vmem:[%s1 + $0x378] sm:$0xff]
    %v140 = vld [vmem:[%s1 + $0x380] sm:$0xff]
    %v141 = vld [vmem:[%s1 + $0x388] sm:$0xff]
    %v142 = vld [vmem:[%s1 + $0x390] sm:$0xff]
    %v143 = vld [vmem:[%s1 + $0x398] sm:$0xff]
    %v144 = vld [vmem:[%s1 + $0x3a0] sm:$0xff]
    %v145 = vld [vmem:[%s1 + $0x3a8] sm:$0xff]
    %v146 = vld [vmem:[%s1 + $0x3b0] sm:$0xff]
    %v147 = vld [vmem:[%s1 + $0x3b8] sm:$0xff]
    %v148 = vld [vmem:[%s1 + $0x3c0] sm:$0xff]
    %v149 = vld [vmem:[%s1 + $0x3c8] sm:$0xff]
    %v150 = vld [vmem:[%s1 + $0x3d0] sm:$0xff]
    %v151 = vld [vmem:[%s1 + $0x3d8] sm:$0xff]
    %v152 = vld [vmem:[%s1 + $0x3e0] sm:$0xff]
    %vm153 = vcmask 850944
    %v155 = vsel %vm153, %v19, 0
    %v158 = vsel %vm153, %v27, 0
    %160 = vmatprep.subr.mxu0 0.0
    %161 = vmatpush1.msra.mxu0 %v28
    %162 = vmatprep.subr.mxu0 0.0
    %163 = vmatpush1.msra.mxu0 %v29
    %164 = vmatprep.subr.mxu0 0.0
    %165 = vmatpush1.msra.mxu0 %v30
    %166 = vmatprep.subr.mxu0 0.0
    %167 = vmatpush1.msra.mxu0 %v31
    %168 = vmatprep.subr.mxu0 0.0
    %169 = vmatpush1.msra.mxu0 %v32
    %170 = vmatprep.subr.mxu0 0.0
    %171 = vmatpush1.msra.mxu0 %v33
    %172 = vmatprep.subr.mxu0 0.0
    %173 = vmatpush1.msra.mxu0 %v34
    %174 = vmatprep.subr.mxu0 0.0
    %175 = vmatpush1.msra.mxu0 %v35
    %176 = vmatprep.subr.mxu0 0.0
    %177 = vmatpush1.msra.mxu0 %v36
    %178 = vmatprep.subr.mxu0 0.0
    %179 = vmatpush1.msra.mxu0 %v37
    %180 = vmatprep.subr.mxu0 0.0
    %181 = vmatpush1.msra.mxu0 %v38
    %182 = vmatprep.subr.mxu0 0.0
    %183 = vmatpush1.msra.mxu0 %v39
    %184 = vmatprep.subr.mxu0 0.0
    %185 = vmatpush1.msra.mxu0 %v40
    %186 = vmatprep.subr.mxu0 0.0
    %187 = vmatpush1.msra.mxu0 %v41
    %188 = vmatprep.subr.mxu0 0.0
    %189 = vmatpush1.msra.mxu0 %v42
    %190 = vmatprep.subr.mxu0 0.0
    %191 = vmatpush1.msra.mxu0 %v43
    %192 = vmatprep.subr.mxu0 0.0
    %193 = vmatpush1.msra.mxu0 %v44
    %194 = vmatprep.subr.mxu0 0.0
    %195 = vmatpush1.msra.mxu0 %v45
    %196 = vmatprep.subr.mxu0 0.0
    %197 = vmatpush1.msra.mxu0 %v46
    %198 = vmatprep.subr.mxu0 0.0
    %199 = vmatpush1.msra.mxu0 %v47
    %200 = vmatprep.subr.mxu0 0.0
    %201 = vmatpush1.msra.mxu0 %v48
    %202 = vmatprep.subr.mxu0 0.0
    %203 = vmatpush1.msra.mxu0 %v49
    %204 = vmatprep.subr.mxu0 0.0
    %205 = vmatpush1.msra.mxu0 %v50
    %206 = vmatprep.subr.mxu0 0.0
    %207 = vmatpush1.msra.mxu0 %v51
    %208 = vmatprep.subr.mxu0 0.0
    %209 = vmatpush1.msra.mxu0 %v52
    %210 = vmatprep.subr.mxu0 0.0
    %211 = vmatpush1.msra.mxu0 %v53
    %212 = vmatprep.subr.mxu0 0.0
    %213 = vmatpush1.msra.mxu0 %v54
    %214 = vmatprep.subr.mxu0 0.0
    %215 = vmatpush1.msra.mxu0 %v55
    %216 = vmatprep.subr.mxu0 0.0
    %217 = vmatpush1.msra.mxu0 %v56
    %218 = vmatprep.subr.mxu0 0.0
    %219 = vmatpush1.msra.mxu0 %v57
    %220 = vmatprep.subr.mxu0 0.0
    %221 = vmatpush1.msra.mxu0 %v58
    %222 = vmatprep.subr.mxu0 0.0
    %223 = vmatpush1.msra.mxu0 %v59
    %224 = vmatprep.mubr.f32.mxu0 %v13
    %225 = vmatmul.mubr.f32.gmra.mrb[0].mxu0 %v12
    %v226 = vpop.f32.mrb[0].mxu0
    %v227 = vadd.f32 0.0, %v226
    %v228 = vpop.f32.mrb[0].mxu0
    %229 = vmatprep.mubr.f32.mxu0 %v21
    %230 = vmatmul.mubr.f32.gmra.mrb[0].mxu0 %v20
    %v231 = vpop.f32.mrb[0].mxu0
    %v232 = vadd.f32 0.0, %v231
    %v233 = vpop.f32.mrb[0].mxu0
    %234 = vdwg.mxu0
    %235 = vmatprep.subr.mxu0 0.0
    %236 = vmatpush1.msra.mxu0 %v60
    %237 = vmatprep.subr.mxu0 0.0
    %238 = vmatpush1.msra.mxu0 %v61
    %239 = vmatprep.subr.mxu0 0.0
    %240 = vmatpush1.msra.mxu0 %v62
    %241 = vmatprep.subr.mxu0 0.0
    %242 = vmatpush1.msra.mxu0 %v63
    %243 = vmatprep.subr.mxu0 0.0
    %244 = vmatpush1.msra.mxu0 %v64
    %245 = vmatprep.subr.mxu0 0.0
    %246 = vmatpush1.msra.mxu0 %v65
    %247 = vmatprep.subr.mxu0 0.0
    %248 = vmatpush1.msra.mxu0 %v66
    %249 = vmatprep.subr.mxu0 0.0
    %250 = vmatpush1.msra.mxu0 %v67
    %251 = vmatprep.subr.mxu0 0.0
    %252 = vmatpush1.msra.mxu0 %v68
    %253 = vmatprep.subr.mxu0 0.0
    %254 = vmatpush1.msra.mxu0 %v69
    %255 = vmatprep.subr.mxu0 0.0
    %256 = vmatpush1.msra.mxu0 %v70
    %257 = vmatprep.subr.mxu0 0.0
    %258 = vmatpush1.msra.mxu0 %v71
    %259 = vmatprep.subr.mxu0 0.0
    %260 = vmatpush1.msra.mxu0 %v72
    %261 = vmatprep.subr.mxu0 0.0
    %262 = vmatpush1.msra.mxu0 %v73
    %263 = vmatprep.subr.mxu0 0.0
    %264 = vmatpush1.msra.mxu0 %v74
    %265 = vmatprep.subr.mxu0 0.0
    %266 = vmatpush1.msra.mxu0 %v75
    %267 = vmatprep.subr.mxu0 0.0
    %268 = vmatpush1.msra.mxu0 %v76
    %269 = vmatprep.subr.mxu0 0.0
    %270 = vmatpush1.msra.mxu0 %v77
    %271 = vmatprep.subr.mxu0 0.0
    %272 = vmatpush1.msra.mxu0 %v78
    %273 = vmatprep.subr.mxu0 0.0
    %274 = vmatpush1.msra.mxu0 %v79
    %275 = vmatprep.subr.mxu0 0.0
    %276 = vmatpush1.msra.mxu0 %v80
    %277 = vmatprep.subr.mxu0 0.0
    %278 = vmatpush1.msra.mxu0 %v81
    %279 = vmatprep.subr.mxu0 0.0
    %280 = vmatpush1.msra.mxu0 %v82
    %281 = vmatprep.subr.mxu0 0.0
    %282 = vmatpush1.msra.mxu0 %v83
    %283 = vmatprep.subr.mxu0 0.0
    %284 = vmatpush1.msra.mxu0 %v84
    %285 = vmatprep.subr.mxu0 0.0
    %286 = vmatpush1.msra.mxu0 %v85
    %287 = vmatprep.subr.mxu0 0.0
    %288 = vmatpush1.msra.mxu0 %v86
    %289 = vmatprep.subr.mxu0 0.0
    %290 = vmatpush1.msra.mxu0 %v87
    %291 = vmatprep.subr.mxu0 0.0
    %292 = vmatpush1.msra.mxu0 %v88
    %293 = vmatprep.subr.mxu0 0.0
    %294 = vmatpush1.msra.mxu0 %v89
    %295 = vmatprep.subr.mxu0 0.0
    %296 = vmatpush1.msra.mxu0 %v90
    %297 = vmatprep.subr.mxu0 0.0
    %298 = vmatpush1.msra.mxu0 %v91
    %299 = vmatprep.mubr.f32.mxu0 %v15
    %300 = vmatmul.mubr.f32.gmra.mrb[0].mxu0 %v14
    %v301 = vpop.f32.mrb[0].mxu0
    %v302 = vadd.f32 %v227, %v301
    %v303 = vpop.f32.mrb[0].mxu0
    %304 = vmatprep.mubr.f32.mxu0 %v23
    %305 = vmatmul.mubr.f32.gmra.mrb[0].mxu0 %v22
    %v306 = vpop.f32.mrb[0].mxu0
    %v307 = vadd.f32 %v232, %v306
    %v308 = vpop.f32.mrb[0].mxu0
    %309 = vdwg.mxu0
    %310 = vmatprep.subr.mxu0 0.0
    %311 = vmatpush1.msra.mxu0 %v92
    %312 = vmatprep.subr.mxu0 0.0
    %313 = vmatpush1.msra.mxu0 %v93
    %314 = vmatprep.subr.mxu0 0.0
    %315 = vmatpush1.msra.mxu0 %v94
    %316 = vmatprep.subr.mxu0 0.0
    %317 = vmatpush1.msra.mxu0 %v95
    %318 = vmatprep.subr.mxu0 0.0
    %319 = vmatpush1.msra.mxu0 %v96
    %320 = vmatprep.subr.mxu0 0.0
    %321 = vmatpush1.msra.mxu0 %v97
    %322 = vmatprep.subr.mxu0 0.0
    %323 = vmatpush1.msra.mxu0 %v98
    %324 = vmatprep.subr.mxu0 0.0
    %325 = vmatpush1.msra.mxu0 %v99
    %326 = vmatprep.subr.mxu0 0.0
    %327 = vmatpush1.msra.mxu0 %v100
    %328 = vmatprep.subr.mxu0 0.0
    %329 = vmatpush1.msra.mxu0 %v101
    %330 = vmatprep.subr.mxu0 0.0
    %331 = vmatpush1.msra.mxu0 %v102
    %332 = vmatprep.subr.mxu0 0.0
    %333 = vmatpush1.msra.mxu0 %v103
    %334 = vmatprep.subr.mxu0 0.0
    %335 = vmatpush1.msra.mxu0 %v104
    %336 = vmatprep.subr.mxu0 0.0
    %337 = vmatpush1.msra.mxu0 %v105
    %338 = vmatprep.subr.mxu0 0.0
    %339 = vmatpush1.msra.mxu0 %v106
    %340 = vmatprep.subr.mxu0 0.0
    %341 = vmatpush1.msra.mxu0 %v107
    %342 = vmatprep.subr.mxu0 0.0
    %343 = vmatpush1.msra.mxu0 %v108
    %344 = vmatprep.subr.mxu0 0.0
    %345 = vmatpush1.msra.mxu0 %v109
    %346 = vmatprep.subr.mxu0 0.0
    %347 = vmatpush1.msra.mxu0 %v110
    %348 = vmatprep.subr.mxu0 0.0
    %349 = vmatpush1.msra.mxu0 %v111
    %350 = vmatprep.subr.mxu0 0.0
    %351 = vmatpush1.msra.mxu0 %v112
    %352 = vmatprep.subr.mxu0 0.0
    %353 = vmatpush1.msra.mxu0 %v113
    %354 = vmatprep.subr.mxu0 0.0
    %355 = vmatpush1.msra.mxu0 %v114
    %356 = vmatprep.subr.mxu0 0.0
    %357 = vmatpush1.msra.mxu0 %v115
    %358 = vmatprep.subr.mxu0 0.0
    %359 = vmatpush1.msra.mxu0 %v116
    %360 = vmatprep.subr.mxu0 0.0
    %361 = vmatpush1.msra.mxu0 %v117
    %362 = vmatprep.subr.mxu0 0.0
    %363 = vmatpush1.msra.mxu0 %v118
    %364 = vmatprep.subr.mxu0 0.0
    %365 = vmatpush1.msra.mxu0 %v119
    %366 = vmatprep.subr.mxu0 0.0
    %367 = vmatpush1.msra.mxu0 %v120
    %368 = vmatprep.subr.mxu0 0.0
    %369 = vmatpush1.msra.mxu0 %v121
    %370 = vmatprep.subr.mxu0 0.0
    %371 = vmatpush1.msra.mxu0 %v122
    %372 = vmatprep.subr.mxu0 0.0
    %373 = vmatpush1.msra.mxu0 %v123
    %374 = vmatprep.mubr.f32.mxu0 %v17
    %375 = vmatmul.mubr.f32.gmra.mrb[0].mxu0 %v16
    %v376 = vpop.f32.mrb[0].mxu0
    %v377 = vadd.f32 %v302, %v376
    %v378 = vpop.f32.mrb[0].mxu0
    %379 = vmatprep.mubr.f32.mxu0 %v25
    %380 = vmatmul.mubr.f32.gmra.mrb[0].mxu0 %v24
    %v381 = vpop.f32.mrb[0].mxu0
    %v382 = vadd.f32 %v307, %v381
    %v383 = vpop.f32.mrb[0].mxu0
    %384 = vdwg.mxu0
    %385 = vmatprep.subr.mxu0 0.0
    %386 = vmatpush1.msra.mxu0 %v124
    %387 = vmatprep.subr.mxu0 0.0
    %388 = vmatpush1.msra.mxu0 %v125
    %389 = vmatprep.subr.mxu0 0.0
    %390 = vmatpush1.msra.mxu0 %v126
    %391 = vmatprep.subr.mxu0 0.0
    %392 = vmatpush1.msra.mxu0 %v127
    %393 = vmatprep.subr.mxu0 0.0
    %394 = vmatpush1.msra.mxu0 %v128
    %395 = vmatprep.subr.mxu0 0.0
    %396 = vmatpush1.msra.mxu0 %v129
    %397 = vmatprep.subr.mxu0 0.0
    %398 = vmatpush1.msra.mxu0 %v130
    %399 = vmatprep.subr.mxu0 0.0
    %400 = vmatpush1.msra.mxu0 %v131
    %401 = vmatprep.subr.mxu0 0.0
    %402 = vmatpush1.msra.mxu0 %v132
    %403 = vmatprep.subr.mxu0 0.0
    %404 = vmatpush1.msra.mxu0 %v133
    %405 = vmatprep.subr.mxu0 0.0
    %406 = vmatpush1.msra.mxu0 %v134
    %407 = vmatprep.subr.mxu0 0.0
    %408 = vmatpush1.msra.mxu0 %v135
    %409 = vmatprep.subr.mxu0 0.0
    %410 = vmatpush1.msra.mxu0 %v136
    %411 = vmatprep.subr.mxu0 0.0
    %412 = vmatpush1.msra.mxu0 %v137
    %413 = vmatprep.subr.mxu0 0.0
    %414 = vmatpush1.msra.mxu0 %v138
    %415 = vmatprep.subr.mxu0 0.0
    %416 = vmatpush1.msra.mxu0 %v139
    %417 = vmatprep.subr.mxu0 0.0
    %418 = vmatpush1.msra.mxu0 %v140
    %419 = vmatprep.subr.mxu0 0.0
    %420 = vmatpush1.msra.mxu0 %v141
    %421 = vmatprep.subr.mxu0 0.0
    %422 = vmatpush1.msra.mxu0 %v142
    %423 = vmatprep.subr.mxu0 0.0
    %424 = vmatpush1.msra.mxu0 %v143
    %425 = vmatprep.subr.mxu0 0.0
    %426 = vmatpush1.msra.mxu0 %v144
    %427 = vmatprep.subr.mxu0 0.0
    %428 = vmatpush1.msra.mxu0 %v145
    %429 = vmatprep.subr.mxu0 0.0
    %430 = vmatpush1.msra.mxu0 %v146
    %431 = vmatprep.subr.mxu0 0.0
    %432 = vmatpush1.msra.mxu0 %v147
    %433 = vmatprep.subr.mxu0 0.0
    %434 = vmatpush1.msra.mxu0 %v148
    %435 = vmatprep.subr.mxu0 0.0
    %436 = vmatpush1.msra.mxu0 %v149
    %437 = vmatprep.subr.mxu0 0.0
    %438 = vmatpush1.msra.mxu0 %v150
    %439 = vmatprep.subr.mxu0 0.0
    %440 = vmatpush1.msra.mxu0 %v151
    %441 = vmatprep.subr.mxu0 0.0
    %442 = vmatpush1.msra.mxu0 %v152
    %443 = vmatprep.subr.mxu0 0.0
    %444 = vmatpush1.msra.mxu0 0.0
    %445 = vmatprep.subr.mxu0 0.0
    %446 = vmatpush1.msra.mxu0 0.0
    %447 = vmatprep.subr.mxu0 0.0
    %448 = vmatpush1.msra.mxu0 0.0
    %449 = vmatprep.mubr.f32.mxu0 %v155
    %450 = vmatmul.mubr.f32.gmra.mrb[0].mxu0 %v18
    %v451 = vpop.f32.mrb[0].mxu0
    %v452 = vadd.f32 %v377, %v451
    %v453 = vpop.f32.mrb[0].mxu0
    %454 = vmatprep.mubr.f32.mxu0 %v158
    %455 = vmatmul.mubr.f32.gmra.mrb[0].mxu0 %v26
    %v456 = vpop.f32.mrb[0].mxu0
    %v457 = vadd.f32 %v382, %v456
    %v458 = vpop.f32.mrb[0].mxu0
    %459 = vdwg.mxu0
    %vm460 = vcmask 261120
    %461 = vst.msk [vmem:[#allocation2] sm:$0xff] %vm460, %v452
    %462 = vst.msk [vmem:[#allocation2 + $0x8] sm:$0xff] %vm460, %v457
    // Predicated region
    $region10: #{tpu_custom_call.1} parent=1 // pred_check
      _
    $region11: #{tpu_custom_call.1} parent=1 // pred_check_branch
      %464 = sbr.rel (0) target = $region13
    $region12: #{tpu_custom_call.1} parent=1 // pred_region
      %s466 = ssub.s32 256, 256
      %467 = vsyncadd [#allocation3], %s466
      %s468 = sshll.u32 [#allocation2], 4
      %s469 = int_to_ptr.vmem [resolvable:$true] %s468
      %474 = dma.vmem_to_hbm [thread:$0]  %s469, 256, %s2, [#allocation3], 128, 128, 8
    $region13: #{tpu_custom_call.1} parent=1 // pred_fallthru
      _
    // Predicated region
    $region14: #{tpu_custom_call.1} parent=1 // pred_check
      _
    $region15: #{tpu_custom_call.1} parent=1 // pred_check_branch
      %476 = sbr.rel (0) target = $region17
    $region16: #{tpu_custom_call.1} parent=1 // pred_region
      %477 = dma.done [#allocation3], 256
    $region17: #{tpu_custom_call.1} parent=1 // pred_fallthru
      _
    %478 = vsyncpa [#allocation3], 1

</llo_original>
